<compile_context>
chip_gen: v7x
topology: tpu7x:2x2x1
jax: 0.10.0
libtpu: 0.0.40
codegen_flags: <defaults>
</compile_context>

<pallas_src>
import functools

import jax
import jax.numpy as jnp
from jax import lax
from jax.experimental import pallas as pl
from jax.experimental.pallas import tpu as pltpu


def _round_up(x, m):
    return ((x + m - 1) // m) * m


def _cdiv(a, b):
    return -(-a // b)


def _pick_row_tile(m, tm):
    """Row tile: multiple of 8, capped at the row count, and heuristically an
    even number of tiles on the parallel axis (v7x has 2 TensorCores)."""
    tm_eff = max(8, min(tm, _round_up(m, 8)))
    n = _cdiv(m, tm_eff)
    if n > 1 and n % 2 == 1:
        tm_eff = max(8, _round_up(_cdiv(m, n + 1), 8))
    return tm_eff


def _vmem_limit(block_bytes):
    """Right-size the scoped VMEM request from the actual block footprint.
    Never request the full physical VMEM (v7x only has 64 MiB / TensorCore)."""
    need = 3 * block_bytes + (8 << 20)          # double buffers + compiler scratch
    return int(min(max(need, 16 << 20), 48 << 20))


# ----------------------------------------------------------------------------
# Pallas kernels
# ----------------------------------------------------------------------------

def _input_proj_kernel(x_ref, w_ref, b_ref, o_ref, acc_ref):
    # 1x1 conv == row-tiled matmul (TM, TK) @ (TK, D), K-tiled reduction with an
    # f32 accumulator scratch; bias added and bf16 cast on the last K step.
    @pl.when(pl.program_id(1) == 0)
    def _init():
        acc_ref[...] = jnp.zeros_like(acc_ref)

    acc_ref[...] += jnp.dot(x_ref[...], w_ref[...],
                            preferred_element_type=jnp.float32)

    @pl.when(pl.program_id(1) == pl.num_programs(1) - 1)
    def _finish():
        o_ref[...] = (acc_ref[...] + b_ref[...]).astype(o_ref.dtype)


def _decode_heads_kernel(x_ref,
                         wq_ref, bq_ref,            # fused [cls | proj_img | isfinal]
                         wt_ref, bt_ref,            # proj_txt
                         w1_ref, b1_ref,            # bbox MLP layer 1
                         w2_ref, b2_ref,            # bbox MLP layer 2
                         w3_ref, b3_ref,            # bbox MLP layer 3
                         o_ref,
                         *, ncp1, ch, n_query_tiles, out_w):
    i = pl.program_id(0)
    x = x_ref[...]                                  # (TM, D) bf16
    tm = x.shape[0]

    @pl.when(i < n_query_tiles)
    def _query_tile():
        # One wide MXU call for class_embed | contrastive_align_projection_image
        # | isfinal_embed (proj_img starts at column NCp1, lane-aligned when
        # NCp1 is a multiple of 128 as in real MDETR).
        head = jnp.dot(x, wq_ref[...],
                       preferred_element_type=jnp.float32) + bq_ref[...]
        nh = ncp1 + ch + 1

        # F.normalize(p=2, dim=-1) on the proj_img columns, done in place with a
        # lane mask (no non-128-aligned slicing / re-concat of `head`).
        col = lax.broadcasted_iota(jnp.int32, head.shape, 1)
        in_img = (col >= ncp1) & (col < ncp1 + ch)
        sq = jnp.sum(jnp.where(in_img, head * head, 0.0), axis=-1, keepdims=True)
        scale = jnp.where(in_img, lax.rsqrt(jnp.maximum(sq, 1e-24)), 1.0)
        head = head * scale

        # bbox_embed: MLP(D, D, 4, num_layers=3) with ReLU, then sigmoid.
        # Only query tiles pay for this.
        h = jnp.maximum(
            jnp.dot(x, w1_ref[...], preferred_element_type=jnp.float32)
            + b1_ref[...], 0.0)
        h = jnp.maximum(
            jnp.dot(h.astype(x.dtype), w2_ref[...],
                    preferred_element_type=jnp.float32) + b2_ref[...], 0.0)
        boxes = jax.nn.sigmoid(
            jnp.dot(h.astype(x.dtype), w3_ref[...],
                    preferred_element_type=jnp.float32) + b3_ref[...])

        pieces = [head, boxes]
        pad = out_w - (nh + 4)
        if pad > 0:
            pieces.append(jnp.zeros((tm, pad), jnp.float32))
        o_ref[...] = jnp.concatenate(pieces, axis=-1)

    @pl.when(i >= n_query_tiles)
    def _text_tile():
        # contrastive_align_projection_text + L2 normalize — the only head text
        # rows need; cls/isfinal/proj_img and the bbox MLP are skipped.
        pt = jnp.dot(x, wt_ref[...],
                     preferred_element_type=jnp.float32) + bt_ref[...]
        pt = pt * lax.rsqrt(jnp.maximum(
            jnp.sum(pt * pt, axis=-1, keepdims=True), 1e-24))
        pieces = [pt]
        pad = out_w - ch
        if pad > 0:
            pieces.append(jnp.zeros((tm, pad), jnp.float32))
        o_ref[...] = jnp.concatenate(pieces, axis=-1)


# ----------------------------------------------------------------------------
# Wrappers
# ----------------------------------------------------------------------------

def input_proj_1x1(src_nchw, w, b, *, tm=512, tk=512):
    """nn.Conv2d(Cin, D, kernel_size=1) on an NCHW feature map.

    Returns the projected map directly as (H*W, B, D) bf16 — the flattened
    layout the downstream transformer consumes (equivalent to
    input_proj(src).flatten(2).permute(2, 0, 1)) — avoiding the NCHW
    round-trip transpose in HBM.
    """
    n, c, h, wd = src_nchw.shape
    d = w.shape[1]
    # Rows ordered (H, W, B) so the output reshapes straight to (H*W, B, D).
    x = jnp.transpose(src_nchw, (2, 3, 0, 1)).reshape(h * wd * n, c)
    x = x.astype(jnp.bfloat16)
    wb = w.astype(jnp.bfloat16)
    m = x.shape[0]

    tm_eff = _pick_row_tile(m, tm)

    # K tiling: prefer a 128-aligned divisor of C, fall back to full K for small
    # C; otherwise zero-pad K so tiles stay VMEM-sized (no full-K fallback).
    if c % tk == 0:
        tk_eff = tk
    elif c <= tk:
        tk_eff = c
    elif c % 256 == 0:
        tk_eff = 256
    elif c % 128 == 0:
        tk_eff = 128
    else:
        tk_eff = tk
        cp = _round_up(c, tk)
        x = jnp.pad(x, ((0, 0), (0, cp - c)))
        wb = jnp.pad(wb, ((0, cp - c), (0, 0)))
        c = cp
    kt = c // tk_eff

    block_bytes = (tm_eff * tk_eff * 2 + tk_eff * d * 2 + d * 4
                   + tm_eff * d * 2 + tm_eff * d * 4)

    out = pl.pallas_call(
        _input_proj_kernel,
        out_shape=jax.ShapeDtypeStruct((m, d), jnp.bfloat16),
        grid=(_cdiv(m, tm_eff), kt),
        in_specs=[
            pl.BlockSpec((tm_eff, tk_eff), lambda i, k: (i, k)),
            pl.BlockSpec((tk_eff, d), lambda i, k: (k, 0)),
            pl.BlockSpec((1, d), lambda i, k: (0, 0)),
        ],
        out_specs=pl.BlockSpec((tm_eff, d), lambda i, k: (i, 0)),
        scratch_shapes=[pltpu.VMEM((tm_eff, d), jnp.float32)],
        compiler_params=pltpu.CompilerParams(
            dimension_semantics=("parallel", "arbitrary"),
            vmem_limit_bytes=_vmem_limit(block_bytes)),
    )(x, wb, b)
    return out.reshape(h * wd, n, d)


def mdetr_decode(hs, text_memory, p, *, tm=512):
    """Reproduces MDETR._decode head compute (qa_dataset=None)."""
    L, B, Q, D = hs.shape
    T, Bt, _ = text_memory.shape
    Mq = L * B * Q
    Mt = T * Bt
    NCp1 = p["w_cls"].shape[1]
    CH = p["w_ci"].shape[1]

    tm_eff = _pick_row_tile(Mq + Mt, tm)
    n_query_tiles = _cdiv(Mq, tm_eff)
    Mq_pad = n_query_tiles * tm_eff
    M = Mq_pad + Mt
    n_tiles = n_query_tiles + _cdiv(Mt, tm_eff)

    # Query rows occupy dedicated leading tiles (zero-padded to a tile boundary),
    # text rows the trailing tiles — so text tiles skip the bbox MLP and the
    # cls/isfinal/proj_image matmuls entirely.  The pad is folded into the one
    # concat that is needed anyway.
    x = jnp.concatenate(
        [hs.reshape(Mq, D).astype(jnp.bfloat16),
         jnp.zeros((Mq_pad - Mq, D), jnp.bfloat16),
         text_memory.reshape(Mt, D).astype(jnp.bfloat16)], axis=0)

    # Fused query-head weight: [class | proj_image | isfinal].
    wq = jnp.concatenate([p["w_cls"], p["w_ci"], p["w_if"]], axis=1).astype(jnp.bfloat16)
    bq = jnp.concatenate([p["b_cls"], p["b_ci"], p["b_if"]], axis=1)
    wt = p["w_ct"].astype(jnp.bfloat16)
    bt = p["b_ct"]
    w1 = p["w_b1"].astype(jnp.bfloat16)
    w2 = p["w_b2"].astype(jnp.bfloat16)
    w3 = p["w_b3"].astype(jnp.bfloat16)

    NHq = NCp1 + CH + 1
    out_w = max(128, _round_up(max(NHq + 4, CH), 128))   # lane-dense output slab

    def _const(a):
        return pl.BlockSpec(a.shape, lambda i: (0, 0))

    kernel = functools.partial(_decode_heads_kernel, ncp1=NCp1, ch=CH,
                               n_query_tiles=n_query_tiles, out_w=out_w)

    weight_bytes = 2 * (wq.size + wt.size + w1.size + w2.size + w3.size)
    bias_bytes = 4 * (bq.size + bt.size + p["b_b1"].size + p["b_b2"].size
                      + p["b_b3"].size)
    block_bytes = tm_eff * D * 2 + tm_eff * out_w * 4 + weight_bytes + bias_bytes

    slab = pl.pallas_call(
        kernel,
        out_shape=jax.ShapeDtypeStruct((M, out_w), jnp.float32),
        grid=(n_tiles,),
        in_specs=[
            pl.BlockSpec((tm_eff, D), lambda i: (i, 0)),
            _const(wq), _const(bq),
            _const(wt), _const(bt),
            _const(w1), _const(p["b_b1"]),
            _const(w2), _const(p["b_b2"]),
            _const(w3), _const(p["b_b3"]),
        ],
        out_specs=pl.BlockSpec((tm_eff, out_w), lambda i: (i, 0)),
        compiler_params=pltpu.CompilerParams(
            dimension_semantics=("parallel",),
            vmem_limit_bytes=_vmem_limit(block_bytes)),
    )(x, wq, bq, wt, bt, w1, p["b_b1"], w2, p["b_b2"], w3, p["b_b3"])

    q_slab = slab[:Mq]
    t_slab = slab[Mq_pad:Mq_pad + Mt]

    outputs_class = q_slab[:, :NCp1].reshape(L, B, Q, NCp1)
    proj_queries = q_slab[:, NCp1:NCp1 + CH].reshape(L, B, Q, CH)
    outputs_isfinal = q_slab[:, NCp1 + CH:NCp1 + CH + 1].reshape(L, B, Q, 1)
    outputs_coord = q_slab[:, NHq:NHq + 4].reshape(L, B, Q, 4)

    # text tokens: project, transpose(0,1), L2-normalize (normalize commutes
    # with the transpose since it is along the last dim).
    proj_tokens = jnp.transpose(t_slab[:, :CH].reshape(T, Bt, CH), (1, 0, 2))

    out = {
        "pred_logits": outputs_class[-1],
        "pred_boxes": outputs_coord[-1],
        "pred_isfinal": outputs_isfinal[-1],
        "proj_queries": proj_queries[-1],
        "proj_tokens": proj_tokens,
        # TODO(synk): 'tokenized' is the raw tokenizer object (non-tensor), skipped.
    }
    # aux_loss=True with contrastive_align_loss=True
    out["aux_outputs"] = [
        {"pred_logits": a, "pred_boxes": b, "proj_queries": c,
         "proj_tokens": proj_tokens}
        for a, b, c in zip(outputs_class[:-1], outputs_coord[:-1],
                           proj_queries[:-1])
    ]
    for i in range(L - 1):
        out["aux_outputs"][i]["pred_isfinal"] = outputs_isfinal[i]
    return out


def mdetr_forward(src, text_memory, hs, params):
    # --- encode side (MDETR-owned part): input_proj 1x1 conv on backbone feats ---
    # TODO(synk): backbone / text_encoder / transformer(encode_and_save=True) are
    # externally injected modules; their outputs (src, text_memory, hs) are inputs.
    proj_src = input_proj_1x1(src, params["w_proj"], params["b_proj"])
    # --- decode side ---
    out = mdetr_decode(hs, text_memory, params)
    # (H*W, B, D) bf16: flattened layout the transformer consumes
    # (== input_proj(src).flatten(2).permute(2, 0, 1)).
    out["input_proj_src"] = proj_src
    return out


# ----------------------------------------------------------------------------
# Deterministic parameter init + demo
# ----------------------------------------------------------------------------

def _linear(key, din, dout, scale=0.1):
    kw, kb = jax.random.split(key)
    w = scale * jax.random.normal(kw, (din, dout), jnp.float32)
    b = scale * jax.random.normal(kb, (1, dout), jnp.float32)
    return w, b


def init_params(key, cin, d, num_classes, ch):
    ks = jax.random.split(key, 8)
    p = {}
    p["w_proj"], p["b_proj"] = _linear(ks[0], cin, d)            # input_proj (1x1 conv)
    p["w_cls"], p["b_cls"] = _linear(ks[1], d, num_classes + 1)  # class_embed
    p["w_b1"], p["b_b1"] = _linear(ks[2], d, d)                  # bbox_embed MLP layer 1
    p["w_b2"], p["b_b2"] = _linear(ks[3], d, d)                  # bbox_embed MLP layer 2
    p["w_b3"], p["b_b3"] = _linear(ks[4], d, 4)                  # bbox_embed MLP layer 3
    p["w_if"], p["b_if"] = _linear(ks[5], d, 1)                  # isfinal_embed
    p["w_ci"], p["b_ci"] = _linear(ks[6], d, ch)                 # contrastive_align_projection_image
    p["w_ct"], p["b_ct"] = _linear(ks[7], d, ch)                 # contrastive_align_projection_text
    return p


if __name__ == "__main__":
    key = jax.random.PRNGKey(0)

    # small config
    B, CIN, H, W = 2, 8, 8, 8   # backbone feature map
    D = 32                      # transformer.d_model (hidden_dim)
    NUM_CLASSES = 6             # class_embed -> 7 logits
    Q = 8                       # num_queries
    L = 3                       # number of decoder layers in hs
    CH = 16                     # contrastive_hdim
    T = 8                       # text sequence length

    k_src, k_hs, k_txt, k_par = jax.random.split(key, 4)
    src = jax.random.normal(k_src, (B, CIN, H, W), jnp.float32)     # backbone output (NCHW)
    hs = jax.random.normal(k_hs, (L, B, Q, D), jnp.float32)         # stand-in transformer decoder output
    text_memory = jax.random.normal(k_txt, (T, B, D), jnp.float32)  # stand-in text encoder memory

    params = init_params(k_par, CIN, D, NUM_CLASSES, CH)

    out = mdetr_forward(src, text_memory, hs, params)
    out = jax.block_until_ready(out)

    # sanity checks on shapes
    assert out["pred_logits"].shape == (B, Q, NUM_CLASSES + 1)
    assert out["pred_boxes"].shape == (B, Q, 4)
    assert out["pred_isfinal"].shape == (B, Q, 1)
    assert out["proj_queries"].shape == (B, Q, CH)
    assert out["proj_tokens"].shape == (B, T, CH)
    assert out["input_proj_src"].shape == (H * W, B, D)   # flattened (HW, B, D) layout
    assert len(out["aux_outputs"]) == L - 1

    # basic numerical sanity
    assert bool(jnp.all(jnp.isfinite(out["pred_boxes"])))
    assert bool(jnp.all((out["pred_boxes"] >= 0.0) & (out["pred_boxes"] <= 1.0)))
    assert bool(jnp.all(jnp.isfinite(out["proj_tokens"].astype(jnp.float32))))
    assert bool(jnp.all(jnp.isfinite(out["input_proj_src"].astype(jnp.float32))))

    print("KERNEL_OK")
</pallas_src>

<mosaic_0001>
module attributes {stable_mosaic.version = 11 : i64} {
  func.func @_input_proj_kernel(%arg0: i32, %arg1: i32, %arg2: memref<128x8xbf16, #tpu.memory_space<vmem>>, %arg3: memref<8x32xbf16, #tpu.memory_space<vmem>>, %arg4: memref<1x32xf32, #tpu.memory_space<vmem>>, %arg5: memref<128x32xbf16, #tpu.memory_space<vmem>>, %arg6: memref<128x32xf32, #tpu.memory_space<vmem>>) attributes {dimension_semantics = [#tpu.dimension_semantics<parallel>, #tpu.dimension_semantics<arbitrary>], iteration_bounds = array<i64: 1, 1>, scalar_prefetch = 0 : i64, scratch_operands = 1 : i64, tpu.core_type = #tpu.core_type<tc>, window_params = [{transform_indices = @transform_0, window_bounds = array<i64: 128, 8>}, {transform_indices = @transform_1, window_bounds = array<i64: 8, 32>}, {pipeline_mode = #tpu.pipeline_mode<synchronous>, transform_indices = @transform_2, window_bounds = array<i64: 1, 32>}, {transform_indices = @transform_3, window_bounds = array<i64: 128, 32>}]} {
    %c0_i32 = arith.constant 0 : i32
    %0 = arith.cmpi eq, %arg1, %c0_i32 : i32
    %1 = arith.extui %0 : i1 to i32
    %c0_i32_0 = arith.constant 0 : i32
    %2 = arith.cmpi ne, %1, %c0_i32_0 : i32
    scf.if %2 {
      %cst_10 = arith.constant 0.000000e+00 : f32
      %12 = vector.broadcast %cst_10 : f32 to vector<128x32xf32>
      %c0_11 = arith.constant 0 : index
      %c0_12 = arith.constant 0 : index
      %13 = vector.load %arg6[%c0_11, %c0_12] : memref<128x32xf32, #tpu.memory_space<vmem>>, vector<128x32xf32>
      tpu.vector_store %arg6[%c0_11, %c0_12], %12 {strides = array<i32>} : memref<128x32xf32, #tpu.memory_space<vmem>>, vector<128x32xf32>,
    } else {
    }
    %c0 = arith.constant 0 : index
    %c0_1 = arith.constant 0 : index
    %3 = vector.load %arg6[%c0, %c0_1] : memref<128x32xf32, #tpu.memory_space<vmem>>, vector<128x32xf32>
    %c0_2 = arith.constant 0 : index
    %c0_3 = arith.constant 0 : index
    %4 = vector.load %arg2[%c0_2, %c0_3] : memref<128x8xbf16, #tpu.memory_space<vmem>>, vector<128x8xbf16>
    %c0_4 = arith.constant 0 : index
    %c0_5 = arith.constant 0 : index
    %5 = vector.load %arg3[%c0_4, %c0_5] : memref<8x32xbf16, #tpu.memory_space<vmem>>, vector<8x32xbf16>
    %cst = arith.constant dense<0.000000e+00> : vector<128x32xf32>
    %6 = tpu.matmul %4, %5, %cst {dimension_numbers = #tpu.dot_dimension_numbers<[1], [0], [0], [1], [0, 0, 1, 1], [], []>} : vector<128x8xbf16>, vector<8x32xbf16>, vector<128x32xf32> -> vector<128x32xf32>
    %7 = arith.addf %3, %6 : vector<128x32xf32>
    %c0_6 = arith.constant 0 : index
    %c0_7 = arith.constant 0 : index
    %8 = vector.load %arg6[%c0_6, %c0_7] : memref<128x32xf32, #tpu.memory_space<vmem>>, vector<128x32xf32>
    tpu.vector_store %arg6[%c0_6, %c0_7], %7 {strides = array<i32>} : memref<128x32xf32, #tpu.memory_space<vmem>>, vector<128x32xf32>,
    %c0_i32_8 = arith.constant 0 : i32
    %9 = arith.cmpi eq, %arg1, %c0_i32_8 : i32
    %10 = arith.extui %9 : i1 to i32
    %c0_i32_9 = arith.constant 0 : i32
    %11 = arith.cmpi ne, %10, %c0_i32_9 : i32
    scf.if %11 {
      %c0_10 = arith.constant 0 : index
      %c0_11 = arith.constant 0 : index
      %12 = vector.load %arg6[%c0_10, %c0_11] : memref<128x32xf32, #tpu.memory_space<vmem>>, vector<128x32xf32>
      %c0_12 = arith.constant 0 : index
      %c0_13 = arith.constant 0 : index
      %13 = vector.load %arg4[%c0_12, %c0_13] : memref<1x32xf32, #tpu.memory_space<vmem>>, vector<1x32xf32>
      %14 = vector.broadcast %13 : vector<1x32xf32> to vector<128x32xf32>
      %15 = arith.addf %12, %14 : vector<128x32xf32>
      %16 = arith.truncf %15 : vector<128x32xf32> to vector<128x32xbf16>
      %c0_14 = arith.constant 0 : index
      %c0_15 = arith.constant 0 : index
      %17 = vector.load %arg5[%c0_14, %c0_15] : memref<128x32xbf16, #tpu.memory_space<vmem>>, vector<128x32xbf16>
      tpu.vector_store %arg5[%c0_14, %c0_15], %16 {strides = array<i32>} : memref<128x32xbf16, #tpu.memory_space<vmem>>, vector<128x32xbf16>,
    } else {
    }
    return
  }
  func.func @transform_0(%arg0: i32, %arg1: i32) -> (i32, i32) {
    %c0_i32 = arith.constant 0 : i32
    return %arg0, %arg1 : i32, i32
  }
  func.func @transform_1(%arg0: i32, %arg1: i32) -> (i32, i32) {
    %c0_i32 = arith.constant 0 : i32
    %c0_i32_0 = arith.constant 0 : i32
    return %arg1, %c0_i32 : i32, i32
  }
  func.func @transform_2(%arg0: i32, %arg1: i32) -> (i32, i32) {
    %c0_i32 = arith.constant 0 : i32
    %c0_i32_0 = arith.constant 0 : i32
    %c0_i32_1 = arith.constant 0 : i32
    return %c0_i32, %c0_i32_0 : i32, i32
  }
  func.func @transform_3(%arg0: i32, %arg1: i32) -> (i32, i32) {
    %c0_i32 = arith.constant 0 : i32
    %c0_i32_0 = arith.constant 0 : i32
    return %arg0, %c0_i32 : i32, i32
  }
}

</mosaic_0001>

<llo_original>
// kernel: tpu_custom_call.1
$region0: #{tpu_custom_call.1}
  #allocation0 [shape = 'u32[]', space=smem, size = 0x4, offset = 0x4, fixed_abs, tag = 'smem constant byte address 0x4 - core index']
  #allocation1 [shape = 'u32[144,128]{1,0:T(1,128)}', space=vmem, size = 0x12000, scoped, tag = 'internal scratch']
  #allocation2 [shape = 'f32[128,32]{1,0:T(8,128)}', space=vmem, size = 0x10000, scoped, tag = 'scratch operand']
  %s0 = inlined_call_operand.vmem [shape: bf16[128,8], index: 0, kind: input, shape index: {}]
  %s1 = inlined_call_operand.vmem [shape: bf16[8,32], index: 1, kind: input, shape index: {}]
  %s2 = inlined_call_operand.vmem [shape: f32[1,32], index: 2, kind: input, shape index: {}]
  %s3 = inlined_call_operand.vmem [shape: bf16[128,32], index: 3, kind: output, shape index: {}]
  %s4 = sld [smem:[#allocation0]]
  $region30: #{tpu_custom_call.1} parent=0
    _
  %s6 = ssub.s32 1, %s4
  %s7 = scalar_select 0, %s6, %s4
  // Predicated region
  $region2: #{tpu_custom_call.1} parent=0 // pred_check
    _
  $region3: #{tpu_custom_call.1} parent=0 // pred_check_branch
    %9 = sbr.rel (0) target = $region5
  $region4: #{tpu_custom_call.1} parent=0 // pred_region
    _
  $region5: #{tpu_custom_call.1} parent=0 // pred_fallthru
    _
  // Predicated region
  $region6: #{tpu_custom_call.1} parent=0 // pred_check
    _
  $region7: #{tpu_custom_call.1} parent=0 // pred_check_branch
    %11 = sbr.rel (0) target = $region9
  $region8: #{tpu_custom_call.1} parent=0 // pred_region
    _
  $region9: #{tpu_custom_call.1} parent=0 // pred_fallthru
    _
  // Predicated region
  $region10: #{tpu_custom_call.1} parent=0 // pred_check
    _
  $region11: #{tpu_custom_call.1} parent=0 // pred_check_branch
    %13 = sbr.rel (0) target = $region13
  $region12: #{tpu_custom_call.1} parent=0 // pred_region
    _
  $region13: #{tpu_custom_call.1} parent=0 // pred_fallthru
    _
  %p15 = scmp.eq.s32.totalorder 0, 0
  // Predicated region
  $region14: #{tpu_custom_call.1} parent=0 // pred_check
    %p16 = pneg %p15
  $region15: #{tpu_custom_call.1} parent=0 // pred_check_branch
    %18 = sbr.rel (%p16) target = $region17
  $region16: #{tpu_custom_call.1} parent=0 // pred_region
    %vm19 = vcmask 261120
    %20 = vst.msk [vmem:[#allocation2] sm:$0xff] %vm19, 0.0
    %21 = vst.msk [vmem:[#allocation2 + $0x8] sm:$0xff] %vm19, 0.0
    %22 = vst.msk [vmem:[#allocation2 + $0x10] sm:$0xff] %vm19, 0.0
    %23 = vst.msk [vmem:[#allocation2 + $0x18] sm:$0xff] %vm19, 0.0
    %24 = vst.msk [vmem:[#allocation2 + $0x20] sm:$0xff] %vm19, 0.0
    %25 = vst.msk [vmem:[#allocation2 + $0x28] sm:$0xff] %vm19, 0.0
    %26 = vst.msk [vmem:[#allocation2 + $0x30] sm:$0xff] %vm19, 0.0
    %27 = vst.msk [vmem:[#allocation2 + $0x38] sm:$0xff] %vm19, 0.0
    %28 = vst.msk [vmem:[#allocation2 + $0x40] sm:$0xff] %vm19, 0.0
    %29 = vst.msk [vmem:[#allocation2 + $0x48] sm:$0xff] %vm19, 0.0
    %30 = vst.msk [vmem:[#allocation2 + $0x50] sm:$0xff] %vm19, 0.0
    %31 = vst.msk [vmem:[#allocation2 + $0x58] sm:$0xff] %vm19, 0.0
    %32 = vst.msk [vmem:[#allocation2 + $0x60] sm:$0xff] %vm19, 0.0
    %33 = vst.msk [vmem:[#allocation2 + $0x68] sm:$0xff] %vm19, 0.0
    %34 = vst.msk [vmem:[#allocation2 + $0x70] sm:$0xff] %vm19, 0.0
    %35 = vst.msk [vmem:[#allocation2 + $0x78] sm:$0xff] %vm19, 0.0
  $region17: #{tpu_custom_call.1} parent=0 // pred_fallthru
    _
  %v36 = vld [vmem:[#allocation2] sm:$0xff]
  %v37 = vld [vmem:[#allocation2 + $0x8] sm:$0xff]
  %v38 = vld [vmem:[#allocation2 + $0x10] sm:$0xff]
  %v39 = vld [vmem:[#allocation2 + $0x18] sm:$0xff]
  %v40 = vld [vmem:[#allocation2 + $0x20] sm:$0xff]
  %v41 = vld [vmem:[#allocation2 + $0x28] sm:$0xff]
  %v42 = vld [vmem:[#allocation2 + $0x30] sm:$0xff]
  %v43 = vld [vmem:[#allocation2 + $0x38] sm:$0xff]
  %v44 = vld [vmem:[#allocation2 + $0x40] sm:$0xff]
  %v45 = vld [vmem:[#allocation2 + $0x48] sm:$0xff]
  %v46 = vld [vmem:[#allocation2 + $0x50] sm:$0xff]
  %v47 = vld [vmem:[#allocation2 + $0x58] sm:$0xff]
  %v48 = vld [vmem:[#allocation2 + $0x60] sm:$0xff]
  %v49 = vld [vmem:[#allocation2 + $0x68] sm:$0xff]
  %v50 = vld [vmem:[#allocation2 + $0x70] sm:$0xff]
  %v51 = vld [vmem:[#allocation2 + $0x78] sm:$0xff]
  %v52 = vld [vmem:[%s0] sm:$0xf]
  %v53 = vld [vmem:[%s0 + $0x4] sm:$0xf]
  %v54 = vld [vmem:[%s0 + $0x8] sm:$0xf]
  %v55 = vld [vmem:[%s0 + $0xc] sm:$0xf]
  %v56 = vld [vmem:[%s0 + $0x10] sm:$0xf]
  %v57 = vld [vmem:[%s0 + $0x14] sm:$0xf]
  %v58 = vld [vmem:[%s0 + $0x18] sm:$0xf]
  %v59 = vld [vmem:[%s0 + $0x1c] sm:$0xf]
  %v60 = vld [vmem:[%s0 + $0x20] sm:$0xf]
  %v61 = vld [vmem:[%s0 + $0x24] sm:$0xf]
  %v62 = vld [vmem:[%s0 + $0x28] sm:$0xf]
  %v63 = vld [vmem:[%s0 + $0x2c] sm:$0xf]
  %v64 = vld [vmem:[%s0 + $0x30] sm:$0xf]
  %v65 = vld [vmem:[%s0 + $0x34] sm:$0xf]
  %v66 = vld [vmem:[%s0 + $0x38] sm:$0xf]
  %v67 = vld [vmem:[%s0 + $0x3c] sm:$0xf]
  %v68 = vld [vmem:[%s1] sm:$0xf]
  %v85 = vunpack.c.l.b16 %v52
  %v86 = vunpack.c.l.b16 %v53
  %v87 = vunpack.c.l.b16 %v54
  %v88 = vunpack.c.l.b16 %v55
  %v89 = vunpack.c.l.b16 %v56
  %v90 = vunpack.c.l.b16 %v57
  %v91 = vunpack.c.l.b16 %v58
  %v92 = vunpack.c.l.b16 %v59
  %v93 = vunpack.c.l.b16 %v60
  %v94 = vunpack.c.l.b16 %v61
  %v95 = vunpack.c.l.b16 %v62
  %v96 = vunpack.c.l.b16 %v63
  %v97 = vunpack.c.l.b16 %v64
  %v98 = vunpack.c.l.b16 %v65
  %v99 = vunpack.c.l.b16 %v66
  %v100 = vunpack.c.l.b16 %v67
  %v101 = vpack.c.b16 %v86, %v85
  %v102 = vpack.c.b16 %v88, %v87
  %v103 = vpack.c.b16 %v90, %v89
  %v104 = vpack.c.b16 %v92, %v91
  %v105 = vpack.c.b16 %v94, %v93
  %v106 = vpack.c.b16 %v96, %v95
  %v107 = vpack.c.b16 %v98, %v97
  %v108 = vpack.c.b16 %v100, %v99
  %vm109 = vcmask 64512
  %v111 = vsel %vm109, %v101, 0
  %v114 = vsel %vm109, %v102, 0
  %v117 = vsel %vm109, %v103, 0
  %v120 = vsel %vm109, %v104, 0
  %v123 = vsel %vm109, %v105, 0
  %v126 = vsel %vm109, %v106, 0
  %v129 = vsel %vm109, %v107, 0
  %v132 = vsel %vm109, %v108, 0
  %vm134 = vcmask 1043456
  %v136 = vsel %vm134, %v68, 0
  %138 = vmatprep.subr.bf16.mxu0 0
  %139 = vmatpush1.bf16.msra.mxu0 %v136
  %140 = vmatprep.subr.bf16.mxu0 0
  %141 = vmatpush1.bf16.msra.mxu0 0
  %142 = vmatprep.subr.bf16.mxu0 0
  %143 = vmatpush1.bf16.msra.mxu0 0
  %144 = vmatprep.subr.bf16.mxu0 0
  %145 = vmatpush1.bf16.msra.mxu0 0
  %146 = vmatprep.subr.bf16.mxu0 0
  %147 = vmatpush1.bf16.msra.mxu0 0
  %148 = vmatprep.subr.bf16.mxu0 0
  %149 = vmatpush1.bf16.msra.mxu0 0
  %150 = vmatprep.subr.bf16.mxu0 0
  %151 = vmatpush1.bf16.msra.mxu0 0
  %152 = vmatprep.subr.bf16.mxu0 0
  %153 = vmatpush1.bf16.msra.mxu0 0
  %154 = vmatprep.subr.bf16.mxu0 0
  %155 = vmatpush1.bf16.msra.mxu0 0
  %156 = vmatprep.subr.bf16.mxu0 0
  %157 = vmatpush1.bf16.msra.mxu0 0
  %158 = vmatprep.subr.bf16.mxu0 0
  %159 = vmatpush1.bf16.msra.mxu0 0
  %160 = vmatprep.subr.bf16.mxu0 0
  %161 = vmatpush1.bf16.msra.mxu0 0
  %162 = vmatprep.subr.bf16.mxu0 0
  %163 = vmatpush1.bf16.msra.mxu0 0
  %164 = vmatprep.subr.bf16.mxu0 0
  %165 = vmatpush1.bf16.msra.mxu0 0
  %166 = vmatprep.subr.bf16.mxu0 0
  %167 = vmatpush1.bf16.msra.mxu0 0
  %168 = vmatprep.subr.bf16.mxu0 0
  %169 = vmatpush1.bf16.msra.mxu0 0
  %170 = vmatprep.mubr.bf16.mxu0 0
  %171 = vmatmul.mubr.bf16.gmra.mrb[0].mxu0 %v111
  %v172 = vpop.f32.mrb[0].mxu0
  %v173 = vadd.f32 0.0, %v172
  %v174 = vpop.f32.mrb[0].mxu0
  %v175 = vpop.f32.mrb[0].mxu0
  %v176 = vadd.f32 0.0, %v175
  %v177 = vpop.f32.mrb[0].mxu0
  %178 = vmatprep.mubr.bf16.mxu0 0
  %179 = vmatmul.mubr.bf16.gmra.mrb[0].mxu0 %v114
  %v180 = vpop.f32.mrb[0].mxu0
  %v181 = vadd.f32 0.0, %v180
  %v182 = vpop.f32.mrb[0].mxu0
  %v183 = vpop.f32.mrb[0].mxu0
  %v184 = vadd.f32 0.0, %v183
  %v185 = vpop.f32.mrb[0].mxu0
  %186 = vmatprep.mubr.bf16.mxu0 0
  %187 = vmatmul.mubr.bf16.gmra.mrb[0].mxu0 %v117
  %v188 = vpop.f32.mrb[0].mxu0
  %v189 = vadd.f32 0.0, %v188
  %v190 = vpop.f32.mrb[0].mxu0
  %v191 = vpop.f32.mrb[0].mxu0
  %v192 = vadd.f32 0.0, %v191
  %v193 = vpop.f32.mrb[0].mxu0
  %194 = vmatprep.mubr.bf16.mxu0 0
  %195 = vmatmul.mubr.bf16.gmra.mrb[0].mxu0 %v120
  %v196 = vpop.f32.mrb[0].mxu0
  %v197 = vadd.f32 0.0, %v196
  %v198 = vpop.f32.mrb[0].mxu0
  %v199 = vpop.f32.mrb[0].mxu0
  %v200 = vadd.f32 0.0, %v199
  %v201 = vpop.f32.mrb[0].mxu0
  %202 = vmatprep.mubr.bf16.mxu0 0
  %203 = vmatmul.mubr.bf16.gmra.mrb[0].mxu0 %v123
  %v204 = vpop.f32.mrb[0].mxu0
  %v205 = vadd.f32 0.0, %v204
  %v206 = vpop.f32.mrb[0].mxu0
  %v207 = vpop.f32.mrb[0].mxu0
  %v208 = vadd.f32 0.0, %v207
  %v209 = vpop.f32.mrb[0].mxu0
  %210 = vmatprep.mubr.bf16.mxu0 0
  %211 = vmatmul.mubr.bf16.gmra.mrb[0].mxu0 %v126
  %v212 = vpop.f32.mrb[0].mxu0
  %v213 = vadd.f32 0.0, %v212
  %v214 = vpop.f32.mrb[0].mxu0
  %v215 = vpop.f32.mrb[0].mxu0
  %v216 = vadd.f32 0.0, %v215
  %v217 = vpop.f32.mrb[0].mxu0
  %218 = vmatprep.mubr.bf16.mxu0 0
  %219 = vmatmul.mubr.bf16.gmra.mrb[0].mxu0 %v129
  %v220 = vpop.f32.mrb[0].mxu0
  %v221 = vadd.f32 0.0, %v220
  %v222 = vpop.f32.mrb[0].mxu0
  %v223 = vpop.f32.mrb[0].mxu0
  %v224 = vadd.f32 0.0, %v223
  %v225 = vpop.f32.mrb[0].mxu0
  %226 = vmatprep.mubr.bf16.mxu0 0
  %227 = vmatmul.mubr.bf16.gmra.mrb[0].mxu0 %v132
  %v228 = vpop.f32.mrb[0].mxu0
  %v229 = vadd.f32 0.0, %v228
  %v230 = vpop.f32.mrb[0].mxu0
  %v231 = vpop.f32.mrb[0].mxu0
  %v232 = vadd.f32 0.0, %v231
  %v233 = vpop.f32.mrb[0].mxu0
  %234 = vdwg.mxu0
  %v235 = vadd.f32 %v36, %v173
  %v236 = vadd.f32 %v37, %v176
  %v237 = vadd.f32 %v38, %v181
  %v238 = vadd.f32 %v39, %v184
  %v239 = vadd.f32 %v40, %v189
  %v240 = vadd.f32 %v41, %v192
  %v241 = vadd.f32 %v42, %v197
  %v242 = vadd.f32 %v43, %v200
  %v243 = vadd.f32 %v44, %v205
  %v244 = vadd.f32 %v45, %v208
  %v245 = vadd.f32 %v46, %v213
  %v246 = vadd.f32 %v47, %v216
  %v247 = vadd.f32 %v48, %v221
  %v248 = vadd.f32 %v49, %v224
  %v249 = vadd.f32 %v50, %v229
  %v250 = vadd.f32 %v51, %v232
  %vm251 = vcmask 261120
  %252 = vst.msk [vmem:[#allocation2] sm:$0xff] %vm251, %v235
  %253 = vst.msk [vmem:[#allocation2 + $0x8] sm:$0xff] %vm251, %v236
  %254 = vst.msk [vmem:[#allocation2 + $0x10] sm:$0xff] %vm251, %v237
  %255 = vst.msk [vmem:[#allocation2 + $0x18] sm:$0xff] %vm251, %v238
  %256 = vst.msk [vmem:[#allocation2 + $0x20] sm:$0xff] %vm251, %v239
  %257 = vst.msk [vmem:[#allocation2 + $0x28] sm:$0xff] %vm251, %v240
  %258 = vst.msk [vmem:[#allocation2 + $0x30] sm:$0xff] %vm251, %v241
  %259 = vst.msk [vmem:[#allocation2 + $0x38] sm:$0xff] %vm251, %v242
  %260 = vst.msk [vmem:[#allocation2 + $0x40] sm:$0xff] %vm251, %v243
  %261 = vst.msk [vmem:[#allocation2 + $0x48] sm:$0xff] %vm251, %v244
  %262 = vst.msk [vmem:[#allocation2 + $0x50] sm:$0xff] %vm251, %v245
  %263 = vst.msk [vmem:[#allocation2 + $0x58] sm:$0xff] %vm251, %v246
  %264 = vst.msk [vmem:[#allocation2 + $0x60] sm:$0xff] %vm251, %v247
  %265 = vst.msk [vmem:[#allocation2 + $0x68] sm:$0xff] %vm251, %v248
  %266 = vst.msk [vmem:[#allocation2 + $0x70] sm:$0xff] %vm251, %v249
  %267 = vst.msk [vmem:[#allocation2 + $0x78] sm:$0xff] %vm251, %v250
  // Predicated region
  $region18: #{tpu_custom_call.1} parent=0 // pred_check
    %p268 = pneg %p15
  $region19: #{tpu_custom_call.1} parent=0 // pred_check_branch
    %270 = sbr.rel (%p268) target = $region21
  $region20: #{tpu_custom_call.1} parent=0 // pred_region
    %v271 = vld [vmem:[#allocation2] sm:$0xff]
    %v272 = vld [vmem:[#allocation2 + $0x8] sm:$0xff]
    %v273 = vld [vmem:[#allocation2 + $0x10] sm:$0xff]
    %v274 = vld [vmem:[#allocation2 + $0x18] sm:$0xff]
    %v275 = vld [vmem:[#allocation2 + $0x20] sm:$0xff]
    %v276 = vld [vmem:[#allocation2 + $0x28] sm:$0xff]
    %v277 = vld [vmem:[#allocation2 + $0x30] sm:$0xff]
    %v278 = vld [vmem:[#allocation2 + $0x38] sm:$0xff]
    %v279 = vld [vmem:[#allocation2 + $0x40] sm:$0xff]
    %v280 = vld [vmem:[#allocation2 + $0x48] sm:$0xff]
    %v281 = vld [vmem:[#allocation2 + $0x50] sm:$0xff]
    %v282 = vld [vmem:[#allocation2 + $0x58] sm:$0xff]
    %v283 = vld [vmem:[#allocation2 + $0x60] sm:$0xff]
    %v284 = vld [vmem:[#allocation2 + $0x68] sm:$0xff]
    %v285 = vld [vmem:[#allocation2 + $0x70] sm:$0xff]
    %v286 = vld [vmem:[#allocation2 + $0x78] sm:$0xff]
    %v287 = vld [vmem:[%s2] sm:$0x1]
    %v289 = vlaneseq
    %v290 = vshrl.u32 %v289, 7
    %v291 = vsub.s32 0, %v290
    %v292 = vrot.slane %v287, %v291
    %v294 = vadd.f32 %v271, %v292
    %v295 = vadd.f32 %v272, %v292
    %v296 = vadd.f32 %v273, %v292
    %v297 = vadd.f32 %v274, %v292
    %v298 = vadd.f32 %v275, %v292
    %v299 = vadd.f32 %v276, %v292
    %v300 = vadd.f32 %v277, %v292
    %v301 = vadd.f32 %v278, %v292
    %v302 = vadd.f32 %v279, %v292
    %v303 = vadd.f32 %v280, %v292
    %v304 = vadd.f32 %v281, %v292
    %v305 = vadd.f32 %v282, %v292
    %v306 = vadd.f32 %v283, %v292
    %v307 = vadd.f32 %v284, %v292
    %v308 = vadd.f32 %v285, %v292
    %v309 = vadd.f32 %v286, %v292
    %v310 = vpack.c.bf16 %v295, %v294
    %v311 = vpack.c.bf16 %v297, %v296
    %v312 = vpack.c.bf16 %v299, %v298
    %v313 = vpack.c.bf16 %v301, %v300
    %v314 = vpack.c.bf16 %v303, %v302
    %v315 = vpack.c.bf16 %v305, %v304
    %v316 = vpack.c.bf16 %v307, %v306
    %v317 = vpack.c.bf16 %v309, %v308
    %v326 = vunpack.c.l.b16 %v310
    %v327 = vunpack.c.h.b16 %v310
    %v328 = vunpack.c.l.b16 %v311
    %v329 = vunpack.c.h.b16 %v311
    %v330 = vunpack.c.l.b16 %v312
    %v331 = vunpack.c.h.b16 %v312
    %v332 = vunpack.c.l.b16 %v313
    %v333 = vunpack.c.h.b16 %v313
    %v334 = vunpack.c.l.b16 %v314
    %v335 = vunpack.c.h.b16 %v314
    %v336 = vunpack.c.l.b16 %v315
    %v337 = vunpack.c.h.b16 %v315
    %v338 = vunpack.c.l.b16 %v316
    %v339 = vunpack.c.h.b16 %v316
    %v340 = vunpack.c.l.b16 %v317
    %v341 = vunpack.c.h.b16 %v317
    %v342 = vpack.c.b16 %v326, %v326
    %v343 = vpack.c.b16 %v327, %v327
    %v344 = vpack.c.b16 %v328, %v328
    %v345 = vpack.c.b16 %v329, %v329
    %v346 = vpack.c.b16 %v330, %v330
    %v347 = vpack.c.b16 %v331, %v331
    %v348 = vpack.c.b16 %v332, %v332
    %v349 = vpack.c.b16 %v333, %v333
    %v350 = vpack.c.b16 %v334, %v334
    %v351 = vpack.c.b16 %v335, %v335
    %v352 = vpack.c.b16 %v336, %v336
    %v353 = vpack.c.b16 %v337, %v337
    %v354 = vpack.c.b16 %v338, %v338
    %v355 = vpack.c.b16 %v339, %v339
    %v356 = vpack.c.b16 %v340, %v340
    %v357 = vpack.c.b16 %v341, %v341
    %vm374 = vcmask 257024
    %375 = vst.msk [vmem:[%s3] sm:$0xf] %vm374, %v342
    %376 = vst.msk [vmem:[%s3 + $0x4] sm:$0xf] %vm374, %v343
    %377 = vst.msk [vmem:[%s3 + $0x8] sm:$0xf] %vm374, %v344
    %378 = vst.msk [vmem:[%s3 + $0xc] sm:$0xf] %vm374, %v345
    %379 = vst.msk [vmem:[%s3 + $0x10] sm:$0xf] %vm374, %v346
    %380 = vst.msk [vmem:[%s3 + $0x14] sm:$0xf] %vm374, %v347
    %381 = vst.msk [vmem:[%s3 + $0x18] sm:$0xf] %vm374, %v348
    %382 = vst.msk [vmem:[%s3 + $0x1c] sm:$0xf] %vm374, %v349
    %383 = vst.msk [vmem:[%s3 + $0x20] sm:$0xf] %vm374, %v350
    %384 = vst.msk [vmem:[%s3 + $0x24] sm:$0xf] %vm374, %v351
    %385 = vst.msk [vmem:[%s3 + $0x28] sm:$0xf] %vm374, %v352
    %386 = vst.msk [vmem:[%s3 + $0x2c] sm:$0xf] %vm374, %v353
    %387 = vst.msk [vmem:[%s3 + $0x30] sm:$0xf] %vm374, %v354
    %388 = vst.msk [vmem:[%s3 + $0x34] sm:$0xf] %vm374, %v355
    %389 = vst.msk [vmem:[%s3 + $0x38] sm:$0xf] %vm374, %v356
    %390 = vst.msk [vmem:[%s3 + $0x3c] sm:$0xf] %vm374, %v357
  $region21: #{tpu_custom_call.1} parent=0 // pred_fallthru
    _
  // Predicated region
  $region22: #{tpu_custom_call.1} parent=0 // pred_check
    _
  $region23: #{tpu_custom_call.1} parent=0 // pred_check_branch
    %392 = sbr.rel (0) target = $region25
  $region24: #{tpu_custom_call.1} parent=0 // pred_region
    _
  $region25: #{tpu_custom_call.1} parent=0 // pred_fallthru
    _
  // Predicated region
  $region26: #{tpu_custom_call.1} parent=0 // pred_check
    _
  $region27: #{tpu_custom_call.1} parent=0 // pred_check_branch
    %394 = sbr.rel (0) target = $region29
  $region28: #{tpu_custom_call.1} parent=0 // pred_region
    _
  $region29: #{tpu_custom_call.1} parent=0 // pred_fallthru
    _

</llo_original>
